<compile_context>
chip_gen: v7x
topology: tpu7x:2x2x1
jax: 0.10.0
libtpu: 0.0.40
codegen_flags: <defaults>
</compile_context>

<pallas_src>
import functools

import jax
import jax.numpy as jnp
from jax.experimental import pallas as pl
from jax.experimental.pallas import tpu as pltpu


def _round_up(x, m):
    return (x + m - 1) // m * m


def _finalize(h, g, b_ref, gate_ref, o_ref):
    """bias + width-gate + h * SiLU(g), store. h/g are f32 (tm, tn)."""
    gate = gate_ref[...]                      # (1, tn) f32, broadcasts over rows
    h = (h + b_ref[0:1, :]) * gate
    g = (g + b_ref[1:2, :]) * gate
    # SiLU(g) = g * sigmoid(g); exp + approx reciprocal both route to the EUP.
    sig = pl.reciprocal(1.0 + jnp.exp(-g), approx=True)
    o_ref[...] = (h * g * sig).astype(o_ref.dtype)


def _swiglu_kernel_single_k(x_ref, wh_ref, wg_ref, b_ref, gate_ref, o_ref):
    """K fits in one block: fused dot -> bias -> gate -> SiLU -> store (no scratch)."""
    h = jnp.dot(x_ref[...], wh_ref[...], preferred_element_type=jnp.float32)
    g = jnp.dot(x_ref[...], wg_ref[...], preferred_element_type=jnp.float32)
    _finalize(h, g, b_ref, gate_ref, o_ref)


def _swiglu_kernel_multi_k(x_ref, wh_ref, wg_ref, b_ref, gate_ref, o_ref,
                           acc_h_ref, acc_g_ref):
    """K-tiled reduction with f32 accumulators; direct write on k==0."""
    k = pl.program_id(2)
    dh = jnp.dot(x_ref[...], wh_ref[...], preferred_element_type=jnp.float32)
    dg = jnp.dot(x_ref[...], wg_ref[...], preferred_element_type=jnp.float32)

    @pl.when(k == 0)
    def _():
        acc_h_ref[...] = dh
        acc_g_ref[...] = dg

    @pl.when(k > 0)
    def _():
        acc_h_ref[...] += dh
        acc_g_ref[...] += dg

    @pl.when(k == pl.num_programs(2) - 1)
    def _():
        _finalize(acc_h_ref[...], acc_g_ref[...], b_ref, gate_ref, o_ref)


def gated_swiglu(x, weight, bias, gate_vec, *, dim_out, gate_width,
                 tm=512, tn=1024, tk=2048,
                 compute_dtype=jnp.bfloat16, out_dtype=None,
                 vmem_limit_bytes=48 * 1024 * 1024):
    """GatedSwiGLU forward.

    x: (..., dim_in); weight: (dim_in, 2*dim_out) (x @ W layout, h columns
    first then g columns); bias: (2*dim_out,) or None; gate_vec: (gate_width,).
    Returns (..., dim_out) in `out_dtype` (default `compute_dtype`, i.e. bf16).

    Tuning (the kernel is weight-bandwidth bound until 2*tm*tn/(tm+2*tn)
    reaches the chip's FLOP/byte crossover):
      * v6e : tm=1024, tn=1024, tk=1024-2048 (~683 FLOP/byte, MXU-bound;
              working set ~36-40 MiB, fits the 48 MiB limit).
      * v7x : tm=512, tn=512-1024, tk=2048 (crossover ~310 FLOP/byte; keeps the
              working set ~15-26 MiB inside the 64 MiB/TC VMEM).  Do NOT copy
              the v6e 1024/1024 setting here.
      * v5e : tm=384-512, tn=512, tk=1024-2048 (crossover ~240 FLOP/byte;
              VMEM is 128 MiB so tile size is not the constraint).
    For zero per-call passes over W, pass `weight` already in `compute_dtype`
    and keep dim_in / dim_out multiples of tk / tn.
    Keep buffer depth at 2 (default): extra pipelining cannot help a
    bandwidth-bound weight stream and only burns VMEM.
    """
    if out_dtype is None:
        out_dtype = compute_dtype

    lead_shape = x.shape[:-1]
    K = x.shape[-1]
    M = 1
    for d in lead_shape:
        M *= d
    assert weight.shape == (K, 2 * dim_out)
    assert dim_out % gate_width == 0
    if bias is None:
        bias = jnp.zeros((2 * dim_out,), jnp.float32)

    # ---- M tiling ------------------------------------------------------------
    itemsize = jnp.dtype(compute_dtype).itemsize
    min_sub = {4: 8, 2: 16, 1: 32}[itemsize]            # sublane packing
    tm = max(min_sub, (tm // min_sub) * min_sub)
    tm = min(tm, _round_up(M, min_sub))
    m_p = _round_up(M, tm)
    mt = m_p // tm

    # ---- N tiling: pad dim_out UP to a multiple of the target tn -------------
    tn = max(128, (tn // 128) * 128)
    np128 = _round_up(dim_out, 128)
    if np128 <= tn:
        tn = np128
        np_ = np128
    elif np128 % tn == 0:
        np_ = np128
    else:
        np_ = _round_up(np128, tn)      # a few wasted padded columns, kept lane-dense
    nt = np_ // tn
    # Megacore: keep >= 2 blocks on a parallel axis so the 2nd TC isn't idle.
    if mt == 1 and nt == 1 and np_ >= 256 and (np_ // 128) % 2 == 0:
        tn = np_ // 2
        nt = 2

    # ---- K tiling: divisor of padded K, or zero-pad K (mathematical no-op) ---
    kp = _round_up(K, 128)
    tk = max(128, (tk // 128) * 128)
    tk_eff = min(tk, kp)
    if kp % tk_eff:
        divisors = [d for d in range(tk_eff - 128, 0, -128) if kp % d == 0]
        best = divisors[0] if divisors else 128
        if best >= 512:
            tk_eff = best               # avoid padding K
        else:
            kp = _round_up(kp, tk_eff)  # pad K with zeros instead
    nk = kp // tk_eff

    pad_n = np_ - dim_out
    pad_k = kp - K

    # ---- prepare operands (no gate fold / interleave: W stays natural) -------
    w = weight.astype(compute_dtype)             # no-op if caller pre-casts
    if pad_n or pad_k:
        w_h = jnp.pad(w[:, :dim_out], ((0, pad_k), (0, pad_n)))
        w_g = jnp.pad(w[:, dim_out:], ((0, pad_k), (0, pad_n)))
        w_p = jnp.concatenate([w_h, w_g], axis=1)        # (kp, 2*np_)
    else:
        w_p = w                                          # (K, 2*dim_out) untouched

    b_h = jnp.pad(bias[:dim_out].astype(jnp.float32), ((0, pad_n),))
    b_g = jnp.pad(bias[dim_out:].astype(jnp.float32), ((0, pad_n),))
    b2 = jnp.stack([b_h, b_g], axis=0)                   # (2, np_) f32, tiny

    group = dim_out // gate_width
    gate_exp = jnp.repeat(gate_vec.astype(jnp.float32), group)   # (dim_out,)
    gate2 = jnp.pad(gate_exp, ((0, pad_n),)).reshape(1, np_)     # (1, np_) f32, tiny

    x2 = x.reshape(M, K).astype(compute_dtype)
    if m_p != M or pad_k:
        x2 = jnp.pad(x2, ((0, m_p - M), (0, pad_k)))

    common_params = pltpu.CompilerParams(
        dimension_semantics=(("parallel", "parallel") if nk == 1
                             else ("parallel", "parallel", "arbitrary")),
        vmem_limit_bytes=vmem_limit_bytes,
    )

    if nk == 1:
        grid = (mt, nt)
        grid_spec = pltpu.PrefetchScalarGridSpec(
            num_scalar_prefetch=0,
            grid=grid,
            in_specs=[
                pl.BlockSpec((tm, tk_eff), lambda i, j: (i, 0)),        # x
                pl.BlockSpec((tk_eff, tn), lambda i, j: (0, j)),        # W_h
                pl.BlockSpec((tk_eff, tn), lambda i, j: (0, j + nt)),   # W_g
                pl.BlockSpec((2, tn), lambda i, j: (0, j)),             # bias h|g
                pl.BlockSpec((1, tn), lambda i, j: (0, j)),             # width gate
            ],
            out_specs=pl.BlockSpec((tm, tn), lambda i, j: (i, j)),
            scratch_shapes=[],
        )
        kernel = _swiglu_kernel_single_k
    else:
        grid = (mt, nt, nk)
        grid_spec = pltpu.PrefetchScalarGridSpec(
            num_scalar_prefetch=0,
            grid=grid,
            in_specs=[
                pl.BlockSpec((tm, tk_eff), lambda i, j, k: (i, k)),        # x
                pl.BlockSpec((tk_eff, tn), lambda i, j, k: (k, j)),        # W_h
                pl.BlockSpec((tk_eff, tn), lambda i, j, k: (k, j + nt)),   # W_g
                pl.BlockSpec((2, tn), lambda i, j, k: (0, j)),             # bias h|g
                pl.BlockSpec((1, tn), lambda i, j, k: (0, j)),             # width gate
            ],
            out_specs=pl.BlockSpec((tm, tn), lambda i, j, k: (i, j)),
            scratch_shapes=[pltpu.VMEM((tm, tn), jnp.float32),   # acc_h
                            pltpu.VMEM((tm, tn), jnp.float32)],  # acc_g
        )
        kernel = _swiglu_kernel_multi_k

    out = pl.pallas_call(
        kernel,
        out_shape=jax.ShapeDtypeStruct((m_p, np_), out_dtype),
        grid_spec=grid_spec,
        compiler_params=common_params,
    )(x2, w_p, w_p, b2, gate2)

    return out[:M, :dim_out].reshape(*lead_shape, dim_out)


def _reference(x, weight, bias, gate_vec, dim_out, gate_width):
    y = jnp.einsum("...k,kn->...n", x, weight) + bias
    h, g = y[..., :dim_out], y[..., dim_out:]
    ge = jnp.repeat(gate_vec, dim_out // gate_width)
    h = h * ge
    g = g * ge
    return h * (g * jax.nn.sigmoid(g))


if __name__ == "__main__":
    key = jax.random.PRNGKey(0)
    k_x, k_w, k_b, k_g, k_x2, k_w2 = jax.random.split(key, 6)

    # ---- test 1: single-K-block fused path (small shapes) --------------------
    B, S = 2, 8
    dim_in, dim_out, gate_width = 32, 64, 32
    x = jax.random.normal(k_x, (B, S, dim_in), dtype=jnp.float32)
    weight = jax.random.normal(k_w, (dim_in, 2 * dim_out), dtype=jnp.float32) * 0.05
    bias = jax.random.normal(k_b, (2 * dim_out,), dtype=jnp.float32) * 0.05
    gate_vec = jax.random.uniform(k_g, (gate_width,), dtype=jnp.float32)

    run1 = jax.jit(functools.partial(
        gated_swiglu, dim_out=dim_out, gate_width=gate_width))
    out1 = run1(x, weight, bias, gate_vec)
    jax.block_until_ready(out1)
    ref1 = _reference(x, weight, bias, gate_vec, dim_out, gate_width)
    assert out1.shape == (B, S, dim_out)
    assert jnp.allclose(out1.astype(jnp.float32), ref1, atol=2e-2, rtol=2e-2), float(
        jnp.max(jnp.abs(out1.astype(jnp.float32) - ref1)))

    # ---- test 2: K-tiled accumulator path (force nk > 1 with small tk) -------
    dim_in2 = 256
    x_b = jax.random.normal(k_x2, (B, S, dim_in2), dtype=jnp.float32)
    weight_b = jax.random.normal(k_w2, (dim_in2, 2 * dim_out), dtype=jnp.float32) * 0.05
    run2 = jax.jit(functools.partial(
        gated_swiglu, dim_out=dim_out, gate_width=gate_width, tk=128))
    out2 = run2(x_b, weight_b, bias, gate_vec)
    jax.block_until_ready(out2)
    ref2 = _reference(x_b, weight_b, bias, gate_vec, dim_out, gate_width)
    assert out2.shape == (B, S, dim_out)
    assert jnp.allclose(out2.astype(jnp.float32), ref2, atol=2e-2, rtol=2e-2), float(
        jnp.max(jnp.abs(out2.astype(jnp.float32) - ref2)))

    print("KERNEL_OK")
</pallas_src>

<mosaic_0001>
module attributes {stable_mosaic.version = 11 : i64} {
  func.func @_swiglu_kernel_single_k(%arg0: i32, %arg1: i32, %arg2: memref<16x128xbf16, #tpu.memory_space<vmem>>, %arg3: memref<128x128xbf16, #tpu.memory_space<vmem>>, %arg4: memref<128x128xbf16, #tpu.memory_space<vmem>>, %arg5: memref<2x128xf32, #tpu.memory_space<vmem>>, %arg6: memref<1x128xf32, #tpu.memory_space<vmem>>, %arg7: memref<16x128xbf16, #tpu.memory_space<vmem>>) attributes {dimension_semantics = [#tpu.dimension_semantics<parallel>, #tpu.dimension_semantics<parallel>], iteration_bounds = array<i64: 1, 1>, scalar_prefetch = 0 : i64, scratch_operands = 0 : i64, tpu.core_type = #tpu.core_type<tc>, window_params = [{transform_indices = @transform_0, window_bounds = array<i64: 16, 128>}, {transform_indices = @transform_1, window_bounds = array<i64: 128, 128>}, {transform_indices = @transform_2, window_bounds = array<i64: 128, 128>}, {transform_indices = @transform_3, window_bounds = array<i64: 2, 128>}, {transform_indices = @transform_4, window_bounds = array<i64: 1, 128>}, {transform_indices = @transform_5, window_bounds = array<i64: 16, 128>}]} {
    %c0 = arith.constant 0 : index
    %c0_0 = arith.constant 0 : index
    %0 = vector.load %arg2[%c0, %c0_0] : memref<16x128xbf16, #tpu.memory_space<vmem>>, vector<16x128xbf16>
    %c0_1 = arith.constant 0 : index
    %c0_2 = arith.constant 0 : index
    %1 = vector.load %arg3[%c0_1, %c0_2] : memref<128x128xbf16, #tpu.memory_space<vmem>>, vector<128x128xbf16>
    %cst = arith.constant dense<0.000000e+00> : vector<16x128xf32>
    %2 = tpu.matmul %0, %1, %cst {dimension_numbers = #tpu.dot_dimension_numbers<[1], [0], [0], [1], [0, 0, 1, 1], [], []>} : vector<16x128xbf16>, vector<128x128xbf16>, vector<16x128xf32> -> vector<16x128xf32>
    %c0_3 = arith.constant 0 : index
    %c0_4 = arith.constant 0 : index
    %3 = vector.load %arg2[%c0_3, %c0_4] : memref<16x128xbf16, #tpu.memory_space<vmem>>, vector<16x128xbf16>
    %c0_5 = arith.constant 0 : index
    %c0_6 = arith.constant 0 : index
    %4 = vector.load %arg4[%c0_5, %c0_6] : memref<128x128xbf16, #tpu.memory_space<vmem>>, vector<128x128xbf16>
    %cst_7 = arith.constant dense<0.000000e+00> : vector<16x128xf32>
    %5 = tpu.matmul %3, %4, %cst_7 {dimension_numbers = #tpu.dot_dimension_numbers<[1], [0], [0], [1], [0, 0, 1, 1], [], []>} : vector<16x128xbf16>, vector<128x128xbf16>, vector<16x128xf32> -> vector<16x128xf32>
    %c0_8 = arith.constant 0 : index
    %c0_9 = arith.constant 0 : index
    %6 = vector.load %arg6[%c0_8, %c0_9] : memref<1x128xf32, #tpu.memory_space<vmem>>, vector<1x128xf32>
    %c0_10 = arith.constant 0 : index
    %c0_11 = arith.constant 0 : index
    %7 = vector.load %arg5[%c0_10, %c0_11] : memref<2x128xf32, #tpu.memory_space<vmem>>, vector<1x128xf32>
    %8 = vector.broadcast %7 : vector<1x128xf32> to vector<16x128xf32>
    %9 = arith.addf %2, %8 : vector<16x128xf32>
    %10 = vector.broadcast %6 : vector<1x128xf32> to vector<16x128xf32>
    %11 = arith.mulf %9, %10 : vector<16x128xf32>
    %c1 = arith.constant 1 : index
    %c0_12 = arith.constant 0 : index
    %12 = vector.load %arg5[%c1, %c0_12] : memref<2x128xf32, #tpu.memory_space<vmem>>, vector<1x128xf32>
    %13 = vector.broadcast %12 : vector<1x128xf32> to vector<16x128xf32>
    %14 = arith.addf %5, %13 : vector<16x128xf32>
    %15 = vector.broadcast %6 : vector<1x128xf32> to vector<16x128xf32>
    %16 = arith.mulf %14, %15 : vector<16x128xf32>
    %cst_13 = arith.constant 0.000000e+00 : f32
    %17 = vector.broadcast %cst_13 : f32 to vector<16x128xf32>
    %18 = arith.subf %17, %16 : vector<16x128xf32>
    %19 = math.exp %18 : vector<16x128xf32>
    %cst_14 = arith.constant 1.000000e+00 : f32
    %20 = vector.broadcast %cst_14 : f32 to vector<16x128xf32>
    %21 = arith.addf %20, %19 : vector<16x128xf32>
    %22 = tpu.reciprocal %21 {approx = true} : vector<16x128xf32> -> vector<16x128xf32>
    %23 = arith.mulf %11, %16 : vector<16x128xf32>
    %24 = arith.mulf %23, %22 : vector<16x128xf32>
    %25 = arith.truncf %24 : vector<16x128xf32> to vector<16x128xbf16>
    %c0_15 = arith.constant 0 : index
    %c0_16 = arith.constant 0 : index
    %26 = vector.load %arg7[%c0_15, %c0_16] : memref<16x128xbf16, #tpu.memory_space<vmem>>, vector<16x128xbf16>
    tpu.vector_store %arg7[%c0_15, %c0_16], %25 {strides = array<i32>} : memref<16x128xbf16, #tpu.memory_space<vmem>>, vector<16x128xbf16>,
    return
  }
  func.func @transform_0(%arg0: i32, %arg1: i32) -> (i32, i32) {
    %c0_i32 = arith.constant 0 : i32
    %c0_i32_0 = arith.constant 0 : i32
    return %arg0, %c0_i32 : i32, i32
  }
  func.func @transform_1(%arg0: i32, %arg1: i32) -> (i32, i32) {
    %c0_i32 = arith.constant 0 : i32
    %c0_i32_0 = arith.constant 0 : i32
    return %c0_i32, %arg1 : i32, i32
  }
  func.func @transform_2(%arg0: i32, %arg1: i32) -> (i32, i32) {
    %c1_i32 = arith.constant 1 : i32
    %0 = arith.addi %arg1, %c1_i32 : i32
    %c0_i32 = arith.constant 0 : i32
    %c0_i32_0 = arith.constant 0 : i32
    return %c0_i32, %0 : i32, i32
  }
  func.func @transform_3(%arg0: i32, %arg1: i32) -> (i32, i32) {
    %c0_i32 = arith.constant 0 : i32
    %c0_i32_0 = arith.constant 0 : i32
    return %c0_i32, %arg1 : i32, i32
  }
  func.func @transform_4(%arg0: i32, %arg1: i32) -> (i32, i32) {
    %c0_i32 = arith.constant 0 : i32
    %c0_i32_0 = arith.constant 0 : i32
    return %c0_i32, %arg1 : i32, i32
  }
  func.func @transform_5(%arg0: i32, %arg1: i32) -> (i32, i32) {
    %c0_i32 = arith.constant 0 : i32
    return %arg0, %arg1 : i32, i32
  }
}

</mosaic_0001>

<llo_original>
// kernel: gated_swiglu.1
$region0: #{gated_swiglu.1}
  #allocation0 [shape = 'u32[]', space=smem, size = 0x4, offset = 0x4, fixed_abs, tag = 'smem constant byte address 0x4 - core index']
  #allocation1 [shape = 'u32[144,128]{1,0:T(1,128)}', space=vmem, size = 0x12000, scoped, tag = 'internal scratch']
  %s0 = inlined_call_operand.vmem [shape: bf16[16,128], index: 0, kind: input, shape index: {}]
  %s1 = inlined_call_operand.vmem [shape: bf16[128,256], index: 1, kind: input, shape index: {}, may-alias: {1,2}]
  %s2 = inlined_call_operand.vmem [shape: bf16[128,256], index: 2, kind: input, shape index: {}, may-alias: {1,2}]
  %s3 = inlined_call_operand.vmem [shape: f32[2,128], index: 3, kind: input, shape index: {}]
  %s4 = inlined_call_operand.vmem [shape: f32[1,128], index: 4, kind: input, shape index: {}]
  %s5 = inlined_call_operand.vmem [shape: bf16[16,128], index: 5, kind: output, shape index: {}]
  %s6 = sld [smem:[#allocation0]]
  $region112: #{gated_swiglu.1} parent=0
    _
  %s8 = ssub.s32 1, %s6
  %s9 = scalar_select 0, %s8, %s6
  $region1: #{gated_swiglu.1} parent=0
    #allocation2 [shape = 'u8[32768]{0}', space=vmem, size = 0x8000, scoped, tag = 'input window, operand 1, single buffered']
    #allocation3 [shape = 'u8[32768]{0}', space=vmem, size = 0x8000, scoped, tag = 'input window, operand 2, single buffered']
    // Predicated region
    $region2: #{gated_swiglu.1} parent=1 // pred_check
      _
    $region3: #{gated_swiglu.1} parent=1 // pred_check_branch
      %11 = sbr.rel (0) target = $region5
    $region4: #{gated_swiglu.1} parent=1 // pred_region
      _
    $region5: #{gated_swiglu.1} parent=1 // pred_fallthru
      _
    // Predicated region
    $region6: #{gated_swiglu.1} parent=1 // pred_check
      _
    $region7: #{gated_swiglu.1} parent=1 // pred_check_branch
      %13 = sbr.rel (0) target = $region9
    $region8: #{gated_swiglu.1} parent=1 // pred_region
      // Predicated region
      $region10: #{gated_swiglu.1} parent=8 // pred_check
        _
      $region11: #{gated_swiglu.1} parent=8 // pred_check_branch
        %15 = sbr.rel (0) target = $region13
      $region12: #{gated_swiglu.1} parent=8 // pred_region
        // Predicated region
        $region14: #{gated_swiglu.1} parent=12 // pred_check
          _
        $region15: #{gated_swiglu.1} parent=12 // pred_check_branch
          %17 = sbr.rel target = $region17
        $region16: #{gated_swiglu.1} parent=12 // pred_region
          // Predicated region
          $region29: #{gated_swiglu.1} parent=16 // pred_check
            _
          $region30: #{gated_swiglu.1} parent=16 // pred_check_branch
            %62 = sbr.rel (0) target = $region32
          $region31: #{gated_swiglu.1} parent=16 // pred_region
            loop: start=0, step=1, limit=1
            $region33: #{gated_swiglu.1} parent=31 // loop_pre_header
              _
            $region34: #{gated_swiglu.1} parent=31 // loop_header
              %s64 = sphi 0, %s68
              %p65 = scmp.ge.s32.totalorder %s64, 1
              %s69 = sphi %s1, %s1
              %s70 = sphi [#allocation2], [#allocation2]
            $region35: #{gated_swiglu.1} parent=31 // loop_header_branch
              %67 = sbr.rel (%p65) target = $region39
            $region36: #{gated_swiglu.1} parent=31 // loop_body
              _
            $region37: #{gated_swiglu.1} parent=31 // loop_footer
              %s68 = sadd.s32 1, %s64
            $region38: #{gated_swiglu.1} parent=31 // loop_footer_branch
              %63 = sbr.rel target = $region34
            $region39: #{gated_swiglu.1} parent=31 // loop_exit
              _
            loop: start=0, step=1, limit=1
            $region40: #{gated_swiglu.1} parent=31 // loop_pre_header
              _
            $region41: #{gated_swiglu.1} parent=31 // loop_header
              %s73 = sphi 0, %s77
              %p74 = scmp.ge.s32.totalorder %s73, 1
              %s78 = sphi %s1, %s1
              %s79 = sphi [#allocation2], [#allocation2]
            $region42: #{gated_swiglu.1} parent=31 // loop_header_branch
              %76 = sbr.rel (%p74) target = $region46
            $region43: #{gated_swiglu.1} parent=31 // loop_body
              %v80 = vld [vmem:[%s78] sm:$0xf]
              %81 = vst [vmem:[%s79] sm:$0xf] %v80
              %v82 = vld [vmem:[%s78 + $0x8] sm:$0xf]
              %83 = vst [vmem:[%s79 + $0x4] sm:$0xf] %v82
              %v84 = vld [vmem:[%s78 + $0x10] sm:$0xf]
              %85 = vst [vmem:[%s79 + $0x8] sm:$0xf] %v84
              %v86 = vld [vmem:[%s78 + $0x18] sm:$0xf]
              %87 = vst [vmem:[%s79 + $0xc] sm:$0xf] %v86
              %v88 = vld [vmem:[%s78 + $0x20] sm:$0xf]
              %89 = vst [vmem:[%s79 + $0x10] sm:$0xf] %v88
              %v90 = vld [vmem:[%s78 + $0x28] sm:$0xf]
              %91 = vst [vmem:[%s79 + $0x14] sm:$0xf] %v90
              %v92 = vld [vmem:[%s78 + $0x30] sm:$0xf]
              %93 = vst [vmem:[%s79 + $0x18] sm:$0xf] %v92
              %v94 = vld [vmem:[%s78 + $0x38] sm:$0xf]
              %95 = vst [vmem:[%s79 + $0x1c] sm:$0xf] %v94
              %v96 = vld [vmem:[%s78 + $0x40] sm:$0xf]
              %97 = vst [vmem:[%s79 + $0x20] sm:$0xf] %v96
              %v98 = vld [vmem:[%s78 + $0x48] sm:$0xf]
              %99 = vst [vmem:[%s79 + $0x24] sm:$0xf] %v98
              %v100 = vld [vmem:[%s78 + $0x50] sm:$0xf]
              %101 = vst [vmem:[%s79 + $0x28] sm:$0xf] %v100
              %v102 = vld [vmem:[%s78 + $0x58] sm:$0xf]
              %103 = vst [vmem:[%s79 + $0x2c] sm:$0xf] %v102
              %v104 = vld [vmem:[%s78 + $0x60] sm:$0xf]
              %105 = vst [vmem:[%s79 + $0x30] sm:$0xf] %v104
              %v106 = vld [vmem:[%s78 + $0x68] sm:$0xf]
              %107 = vst [vmem:[%s79 + $0x34] sm:$0xf] %v106
              %v108 = vld [vmem:[%s78 + $0x70] sm:$0xf]
              %109 = vst [vmem:[%s79 + $0x38] sm:$0xf] %v108
              %v110 = vld [vmem:[%s78 + $0x78] sm:$0xf]
              %111 = vst [vmem:[%s79 + $0x3c] sm:$0xf] %v110
            $region44: #{gated_swiglu.1} parent=31 // loop_footer
              %s77 = sadd.s32 1, %s73
            $region45: #{gated_swiglu.1} parent=31 // loop_footer_branch
              %72 = sbr.rel target = $region41
            $region46: #{gated_swiglu.1} parent=31 // loop_exit
              _
          $region32: #{gated_swiglu.1} parent=16 // pred_fallthru
            _
        $region17: #{gated_swiglu.1} parent=12 // pred_fallthru
          _
        // Predicated region
        $region18: #{gated_swiglu.1} parent=12 // pred_check
          _
        $region19: #{gated_swiglu.1} parent=12 // pred_check_branch
          %19 = sbr.rel (0) target = $region21
        $region20: #{gated_swiglu.1} parent=12 // pred_region
          loop: start=0, step=1, limit=1
          $region22: #{gated_swiglu.1} parent=20 // loop_pre_header
            _
          $region23: #{gated_swiglu.1} parent=20 // loop_header
            %s22 = sphi 0, %s26
            %p23 = scmp.ge.s32.totalorder %s22, 1
            %s27 = sphi %s1, %s1
            %s28 = sphi [#allocation2], [#allocation2]
          $region24: #{gated_swiglu.1} parent=20 // loop_header_branch
            %25 = sbr.rel (%p23) target = $region28
          $region25: #{gated_swiglu.1} parent=20 // loop_body
            %v29 = vld [vmem:[%s27] sm:$0xf]
            %30 = vst [vmem:[%s28] sm:$0xf] %v29
            %v31 = vld [vmem:[%s27 + $0x8] sm:$0xf]
            %32 = vst [vmem:[%s28 + $0x4] sm:$0xf] %v31
            %v33 = vld [vmem:[%s27 + $0x10] sm:$0xf]
            %34 = vst [vmem:[%s28 + $0x8] sm:$0xf] %v33
            %v35 = vld [vmem:[%s27 + $0x18] sm:$0xf]
            %36 = vst [vmem:[%s28 + $0xc] sm:$0xf] %v35
            %v37 = vld [vmem:[%s27 + $0x20] sm:$0xf]
            %38 = vst [vmem:[%s28 + $0x10] sm:$0xf] %v37
            %v39 = vld [vmem:[%s27 + $0x28] sm:$0xf]
            %40 = vst [vmem:[%s28 + $0x14] sm:$0xf] %v39
            %v41 = vld [vmem:[%s27 + $0x30] sm:$0xf]
            %42 = vst [vmem:[%s28 + $0x18] sm:$0xf] %v41
            %v43 = vld [vmem:[%s27 + $0x38] sm:$0xf]
            %44 = vst [vmem:[%s28 + $0x1c] sm:$0xf] %v43
            %v45 = vld [vmem:[%s27 + $0x40] sm:$0xf]
            %46 = vst [vmem:[%s28 + $0x20] sm:$0xf] %v45
            %v47 = vld [vmem:[%s27 + $0x48] sm:$0xf]
            %48 = vst [vmem:[%s28 + $0x24] sm:$0xf] %v47
            %v49 = vld [vmem:[%s27 + $0x50] sm:$0xf]
            %50 = vst [vmem:[%s28 + $0x28] sm:$0xf] %v49
            %v51 = vld [vmem:[%s27 + $0x58] sm:$0xf]
            %52 = vst [vmem:[%s28 + $0x2c] sm:$0xf] %v51
            %v53 = vld [vmem:[%s27 + $0x60] sm:$0xf]
            %54 = vst [vmem:[%s28 + $0x30] sm:$0xf] %v53
            %v55 = vld [vmem:[%s27 + $0x68] sm:$0xf]
            %56 = vst [vmem:[%s28 + $0x34] sm:$0xf] %v55
            %v57 = vld [vmem:[%s27 + $0x70] sm:$0xf]
            %58 = vst [vmem:[%s28 + $0x38] sm:$0xf] %v57
            %v59 = vld [vmem:[%s27 + $0x78] sm:$0xf]
            %60 = vst [vmem:[%s28 + $0x3c] sm:$0xf] %v59
          $region26: #{gated_swiglu.1} parent=20 // loop_footer
            %s26 = sadd.s32 1, %s22
          $region27: #{gated_swiglu.1} parent=20 // loop_footer_branch
            %21 = sbr.rel target = $region23
          $region28: #{gated_swiglu.1} parent=20 // loop_exit
            _
        $region21: #{gated_swiglu.1} parent=12 // pred_fallthru
          _
      $region13: #{gated_swiglu.1} parent=8 // pred_fallthru
        _
      %112 = vnop
    $region9: #{gated_swiglu.1} parent=1 // pred_fallthru
      _
    // Predicated region
    $region47: #{gated_swiglu.1} parent=1 // pred_check
      _
    $region48: #{gated_swiglu.1} parent=1 // pred_check_branch
      %114 = sbr.rel (0) target = $region50
    $region49: #{gated_swiglu.1} parent=1 // pred_region
      %s115 = sadd.s32 0, 1
      %s116 = smul.addr %s115, 4
      %s117 = scalar_lea.vmem %s2, %s116
      // Predicated region
      $region51: #{gated_swiglu.1} parent=49 // pred_check
        _
      $region52: #{gated_swiglu.1} parent=49 // pred_check_branch
        %119 = sbr.rel (0) target = $region54
      $region53: #{gated_swiglu.1} parent=49 // pred_region
        // Predicated region
        $region55: #{gated_swiglu.1} parent=53 // pred_check
          _
        $region56: #{gated_swiglu.1} parent=53 // pred_check_branch
          %121 = sbr.rel target = $region58
        $region57: #{gated_swiglu.1} parent=53 // pred_region
          // Predicated region
          $region70: #{gated_swiglu.1} parent=57 // pred_check
            _
          $region71: #{gated_swiglu.1} parent=57 // pred_check_branch
            %166 = sbr.rel (0) target = $region73
          $region72: #{gated_swiglu.1} parent=57 // pred_region
            loop: start=0, step=1, limit=1
            $region74: #{gated_swiglu.1} parent=72 // loop_pre_header
              _
            $region75: #{gated_swiglu.1} parent=72 // loop_header
              %s168 = sphi 0, %s172
              %p169 = scmp.ge.s32.totalorder %s168, 1
              %s173 = sphi %s117, %s117
              %s174 = sphi [#allocation3], [#allocation3]
            $region76: #{gated_swiglu.1} parent=72 // loop_header_branch
              %171 = sbr.rel (%p169) target = $region80
            $region77: #{gated_swiglu.1} parent=72 // loop_body
              _
            $region78: #{gated_swiglu.1} parent=72 // loop_footer
              %s172 = sadd.s32 1, %s168
            $region79: #{gated_swiglu.1} parent=72 // loop_footer_branch
              %167 = sbr.rel target = $region75
            $region80: #{gated_swiglu.1} parent=72 // loop_exit
              _
            loop: start=0, step=1, limit=1
            $region81: #{gated_swiglu.1} parent=72 // loop_pre_header
              _
            $region82: #{gated_swiglu.1} parent=72 // loop_header
              %s177 = sphi 0, %s181
              %p178 = scmp.ge.s32.totalorder %s177, 1
              %s182 = sphi %s117, %s117
              %s183 = sphi [#allocation3], [#allocation3]
            $region83: #{gated_swiglu.1} parent=72 // loop_header_branch
              %180 = sbr.rel (%p178) target = $region87
            $region84: #{gated_swiglu.1} parent=72 // loop_body
              %v184 = vld [vmem:[%s182] sm:$0xf]
              %185 = vst [vmem:[%s183] sm:$0xf] %v184
              %v186 = vld [vmem:[%s182 + $0x8] sm:$0xf]
              %187 = vst [vmem:[%s183 + $0x4] sm:$0xf] %v186
              %v188 = vld [vmem:[%s182 + $0x10] sm:$0xf]
              %189 = vst [vmem:[%s183 + $0x8] sm:$0xf] %v188
              %v190 = vld [vmem:[%s182 + $0x18] sm:$0xf]
              %191 = vst [vmem:[%s183 + $0xc] sm:$0xf] %v190
              %v192 = vld [vmem:[%s182 + $0x20] sm:$0xf]
              %193 = vst [vmem:[%s183 + $0x10] sm:$0xf] %v192
              %v194 = vld [vmem:[%s182 + $0x28] sm:$0xf]
              %195 = vst [vmem:[%s183 + $0x14] sm:$0xf] %v194
              %v196 = vld [vmem:[%s182 + $0x30] sm:$0xf]
              %197 = vst [vmem:[%s183 + $0x18] sm:$0xf] %v196
              %v198 = vld [vmem:[%s182 + $0x38] sm:$0xf]
              %199 = vst [vmem:[%s183 + $0x1c] sm:$0xf] %v198
              %v200 = vld [vmem:[%s182 + $0x40] sm:$0xf]
              %201 = vst [vmem:[%s183 + $0x20] sm:$0xf] %v200
              %v202 = vld [vmem:[%s182 + $0x48] sm:$0xf]
              %203 = vst [vmem:[%s183 + $0x24] sm:$0xf] %v202
              %v204 = vld [vmem:[%s182 + $0x50] sm:$0xf]
              %205 = vst [vmem:[%s183 + $0x28] sm:$0xf] %v204
              %v206 = vld [vmem:[%s182 + $0x58] sm:$0xf]
              %207 = vst [vmem:[%s183 + $0x2c] sm:$0xf] %v206
              %v208 = vld [vmem:[%s182 + $0x60] sm:$0xf]
              %209 = vst [vmem:[%s183 + $0x30] sm:$0xf] %v208
              %v210 = vld [vmem:[%s182 + $0x68] sm:$0xf]
              %211 = vst [vmem:[%s183 + $0x34] sm:$0xf] %v210
              %v212 = vld [vmem:[%s182 + $0x70] sm:$0xf]
              %213 = vst [vmem:[%s183 + $0x38] sm:$0xf] %v212
              %v214 = vld [vmem:[%s182 + $0x78] sm:$0xf]
              %215 = vst [vmem:[%s183 + $0x3c] sm:$0xf] %v214
            $region85: #{gated_swiglu.1} parent=72 // loop_footer
              %s181 = sadd.s32 1, %s177
            $region86: #{gated_swiglu.1} parent=72 // loop_footer_branch
              %176 = sbr.rel target = $region82
            $region87: #{gated_swiglu.1} parent=72 // loop_exit
              _
          $region73: #{gated_swiglu.1} parent=57 // pred_fallthru
            _
        $region58: #{gated_swiglu.1} parent=53 // pred_fallthru
          _
        // Predicated region
        $region59: #{gated_swiglu.1} parent=53 // pred_check
          _
        $region60: #{gated_swiglu.1} parent=53 // pred_check_branch
          %123 = sbr.rel (0) target = $region62
        $region61: #{gated_swiglu.1} parent=53 // pred_region
          loop: start=0, step=1, limit=1
          $region63: #{gated_swiglu.1} parent=61 // loop_pre_header
            _
          $region64: #{gated_swiglu.1} parent=61 // loop_header
            %s126 = sphi 0, %s130
            %p127 = scmp.ge.s32.totalorder %s126, 1
            %s131 = sphi %s117, %s117
            %s132 = sphi [#allocation3], [#allocation3]
          $region65: #{gated_swiglu.1} parent=61 // loop_header_branch
            %129 = sbr.rel (%p127) target = $region69
          $region66: #{gated_swiglu.1} parent=61 // loop_body
            %v133 = vld [vmem:[%s131] sm:$0xf]
            %134 = vst [vmem:[%s132] sm:$0xf] %v133
            %v135 = vld [vmem:[%s131 + $0x8] sm:$0xf]
            %136 = vst [vmem:[%s132 + $0x4] sm:$0xf] %v135
            %v137 = vld [vmem:[%s131 + $0x10] sm:$0xf]
            %138 = vst [vmem:[%s132 + $0x8] sm:$0xf] %v137
            %v139 = vld [vmem:[%s131 + $0x18] sm:$0xf]
            %140 = vst [vmem:[%s132 + $0xc] sm:$0xf] %v139
            %v141 = vld [vmem:[%s131 + $0x20] sm:$0xf]
            %142 = vst [vmem:[%s132 + $0x10] sm:$0xf] %v141
            %v143 = vld [vmem:[%s131 + $0x28] sm:$0xf]
            %144 = vst [vmem:[%s132 + $0x14] sm:$0xf] %v143
            %v145 = vld [vmem:[%s131 + $0x30] sm:$0xf]
            %146 = vst [vmem:[%s132 + $0x18] sm:$0xf] %v145
            %v147 = vld [vmem:[%s131 + $0x38] sm:$0xf]
            %148 = vst [vmem:[%s132 + $0x1c] sm:$0xf] %v147
            %v149 = vld [vmem:[%s131 + $0x40] sm:$0xf]
            %150 = vst [vmem:[%s132 + $0x20] sm:$0xf] %v149
            %v151 = vld [vmem:[%s131 + $0x48] sm:$0xf]
            %152 = vst [vmem:[%s132 + $0x24] sm:$0xf] %v151
            %v153 = vld [vmem:[%s131 + $0x50] sm:$0xf]
            %154 = vst [vmem:[%s132 + $0x28] sm:$0xf] %v153
            %v155 = vld [vmem:[%s131 + $0x58] sm:$0xf]
            %156 = vst [vmem:[%s132 + $0x2c] sm:$0xf] %v155
            %v157 = vld [vmem:[%s131 + $0x60] sm:$0xf]
            %158 = vst [vmem:[%s132 + $0x30] sm:$0xf] %v157
            %v159 = vld [vmem:[%s131 + $0x68] sm:$0xf]
            %160 = vst [vmem:[%s132 + $0x34] sm:$0xf] %v159
            %v161 = vld [vmem:[%s131 + $0x70] sm:$0xf]
            %162 = vst [vmem:[%s132 + $0x38] sm:$0xf] %v161
            %v163 = vld [vmem:[%s131 + $0x78] sm:$0xf]
            %164 = vst [vmem:[%s132 + $0x3c] sm:$0xf] %v163
          $region67: #{gated_swiglu.1} parent=61 // loop_footer
            %s130 = sadd.s32 1, %s126
          $region68: #{gated_swiglu.1} parent=61 // loop_footer_branch
            %125 = sbr.rel target = $region64
          $region69: #{gated_swiglu.1} parent=61 // loop_exit
            _
        $region62: #{gated_swiglu.1} parent=53 // pred_fallthru
          _
      $region54: #{gated_swiglu.1} parent=49 // pred_fallthru
        _
      %216 = vnop
    $region50: #{gated_swiglu.1} parent=1 // pred_fallthru
      _
    // Predicated region
    $region88: #{gated_swiglu.1} parent=1 // pred_check
      _
    $region89: #{gated_swiglu.1} parent=1 // pred_check_branch
      %218 = sbr.rel (0) target = $region91
    $region90: #{gated_swiglu.1} parent=1 // pred_region
      _
    $region91: #{gated_swiglu.1} parent=1 // pred_fallthru
      _
    // Predicated region
    $region92: #{gated_swiglu.1} parent=1 // pred_check
      _
    $region93: #{gated_swiglu.1} parent=1 // pred_check_branch
      %220 = sbr.rel (0) target = $region95
    $region94: #{gated_swiglu.1} parent=1 // pred_region
      _
    $region95: #{gated_swiglu.1} parent=1 // pred_fallthru
      _
    // Predicated region
    $region96: #{gated_swiglu.1} parent=1 // pred_check
      _
    $region97: #{gated_swiglu.1} parent=1 // pred_check_branch
      %222 = sbr.rel (0) target = $region99
    $region98: #{gated_swiglu.1} parent=1 // pred_region
      _
    $region99: #{gated_swiglu.1} parent=1 // pred_fallthru
      _
    // Predicated region
    $region100: #{gated_swiglu.1} parent=1 // pred_check
      _
    $region101: #{gated_swiglu.1} parent=1 // pred_check_branch
      %224 = sbr.rel (0) target = $region103
    $region102: #{gated_swiglu.1} parent=1 // pred_region
      _
    $region103: #{gated_swiglu.1} parent=1 // pred_fallthru
      _
    %s225 = sadd.s32 0, 1
    %v227 = vld [vmem:[%s0] sm:$0xf]
    %v228 = vld [vmem:[%s0 + $0x4] sm:$0xf]
    %v229 = vld [vmem:[#allocation2] sm:$0xf]
    %v230 = vld [vmem:[#allocation2 + $0x4] sm:$0xf]
    %v231 = vld [vmem:[#allocation2 + $0x8] sm:$0xf]
    %v232 = vld [vmem:[#allocation2 + $0xc] sm:$0xf]
    %v233 = vld [vmem:[#allocation2 + $0x10] sm:$0xf]
    %v234 = vld [vmem:[#allocation2 + $0x14] sm:$0xf]
    %v235 = vld [vmem:[#allocation2 + $0x18] sm:$0xf]
    %v236 = vld [vmem:[#allocation2 + $0x1c] sm:$0xf]
    %v237 = vld [vmem:[#allocation2 + $0x20] sm:$0xf]
    %v238 = vld [vmem:[#allocation2 + $0x24] sm:$0xf]
    %v239 = vld [vmem:[#allocation2 + $0x28] sm:$0xf]
    %v240 = vld [vmem:[#allocation2 + $0x2c] sm:$0xf]
    %v241 = vld [vmem:[#allocation2 + $0x30] sm:$0xf]
    %v242 = vld [vmem:[#allocation2 + $0x34] sm:$0xf]
    %v243 = vld [vmem:[#allocation2 + $0x38] sm:$0xf]
    %v244 = vld [vmem:[#allocation2 + $0x3c] sm:$0xf]
    %v245 = vld [vmem:[#allocation3] sm:$0xf]
    %v246 = vld [vmem:[#allocation3 + $0x4] sm:$0xf]
    %v247 = vld [vmem:[#allocation3 + $0x8] sm:$0xf]
    %v248 = vld [vmem:[#allocation3 + $0xc] sm:$0xf]
    %v249 = vld [vmem:[#allocation3 + $0x10] sm:$0xf]
    %v250 = vld [vmem:[#allocation3 + $0x14] sm:$0xf]
    %v251 = vld [vmem:[#allocation3 + $0x18] sm:$0xf]
    %v252 = vld [vmem:[#allocation3 + $0x1c] sm:$0xf]
    %v253 = vld [vmem:[#allocation3 + $0x20] sm:$0xf]
    %v254 = vld [vmem:[#allocation3 + $0x24] sm:$0xf]
    %v255 = vld [vmem:[#allocation3 + $0x28] sm:$0xf]
    %v256 = vld [vmem:[#allocation3 + $0x2c] sm:$0xf]
    %v257 = vld [vmem:[#allocation3 + $0x30] sm:$0xf]
    %v258 = vld [vmem:[#allocation3 + $0x34] sm:$0xf]
    %v259 = vld [vmem:[#allocation3 + $0x38] sm:$0xf]
    %v260 = vld [vmem:[#allocation3 + $0x3c] sm:$0xf]
    %v261 = vld [vmem:[%s4] sm:$0x1]
    %v262 = vld [vmem:[%s3] sm:$0x1]
    %v263 = vlaneseq
    %v264 = vshrl.u32 %v263, 7
    %v265 = vsub.s32 0, %v264
    %v266 = vrot.slane %v262, %v265
    %v269 = vunpack.c.l.b16 %v227
    %v270 = vunpack.c.l.b16 %v228
    %v271 = vpack.c.b16 %v270, %v269
    %v289 = vunpack.c.l.b16 %v229
    %v290 = vunpack.c.l.b16 %v230
    %v291 = vunpack.c.l.b16 %v231
    %v292 = vunpack.c.l.b16 %v232
    %v293 = vunpack.c.l.b16 %v233
    %v294 = vunpack.c.l.b16 %v234
    %v295 = vunpack.c.l.b16 %v235
    %v296 = vunpack.c.l.b16 %v236
    %v297 = vunpack.c.l.b16 %v237
    %v298 = vunpack.c.l.b16 %v238
    %v299 = vunpack.c.l.b16 %v239
    %v300 = vunpack.c.l.b16 %v240
    %v301 = vunpack.c.l.b16 %v241
    %v302 = vunpack.c.l.b16 %v242
    %v303 = vunpack.c.l.b16 %v243
    %v304 = vunpack.c.l.b16 %v244
    %v305 = vpack.c.b16 %v290, %v289
    %v306 = vpack.c.b16 %v292, %v291
    %v307 = vpack.c.b16 %v294, %v293
    %v308 = vpack.c.b16 %v296, %v295
    %v309 = vpack.c.b16 %v298, %v297
    %v310 = vpack.c.b16 %v300, %v299
    %v311 = vpack.c.b16 %v302, %v301
    %v312 = vpack.c.b16 %v304, %v303
    %321 = vmatprep.subr.bf16.mxu0 0
    %322 = vmatpush1.bf16.msra.mxu0 %v305
    %323 = vmatprep.subr.bf16.mxu0 0
    %324 = vmatpush1.bf16.msra.mxu0 %v306
    %325 = vmatprep.subr.bf16.mxu0 0
    %326 = vmatpush1.bf16.msra.mxu0 %v307
    %327 = vmatprep.subr.bf16.mxu0 0
    %328 = vmatpush1.bf16.msra.mxu0 %v308
    %329 = vmatprep.subr.bf16.mxu0 0
    %330 = vmatpush1.bf16.msra.mxu0 %v309
    %331 = vmatprep.subr.bf16.mxu0 0
    %332 = vmatpush1.bf16.msra.mxu0 %v310
    %333 = vmatprep.subr.bf16.mxu0 0
    %334 = vmatpush1.bf16.msra.mxu0 %v311
    %335 = vmatprep.subr.bf16.mxu0 0
    %336 = vmatpush1.bf16.msra.mxu0 %v312
    %337 = vmatprep.subr.bf16.mxu0 0
    %338 = vmatpush1.bf16.msra.mxu0 0
    %339 = vmatprep.subr.bf16.mxu0 0
    %340 = vmatpush1.bf16.msra.mxu0 0
    %341 = vmatprep.subr.bf16.mxu0 0
    %342 = vmatpush1.bf16.msra.mxu0 0
    %343 = vmatprep.subr.bf16.mxu0 0
    %344 = vmatpush1.bf16.msra.mxu0 0
    %345 = vmatprep.subr.bf16.mxu0 0
    %346 = vmatpush1.bf16.msra.mxu0 0
    %347 = vmatprep.subr.bf16.mxu0 0
    %348 = vmatpush1.bf16.msra.mxu0 0
    %349 = vmatprep.subr.bf16.mxu0 0
    %350 = vmatpush1.bf16.msra.mxu0 0
    %351 = vmatprep.subr.bf16.mxu0 0
    %352 = vmatpush1.bf16.msra.mxu0 0
    %353 = vmatprep.mubr.bf16.mxu0 0
    %354 = vmatmul.mubr.bf16.gmra.mrb[0].mxu0 %v271
    %v355 = vpop.f32.mrb[0].mxu0
    %v356 = vadd.f32 %v266, %v355
    %v357 = vpop.f32.mrb[0].mxu0
    %v358 = vpop.f32.mrb[0].mxu0
    %v359 = vadd.f32 %v266, %v358
    %v360 = vpop.f32.mrb[0].mxu0
    %361 = vdwg.mxu0
    %v363 = vlaneseq
    %v364 = vshrl.u32 %v363, 7
    %v365 = vsub.s32 0, %v364
    %v366 = vrot.slane %v261, %v365
    %v368 = vmul.f32 %v356, %v366
    %v369 = vmul.f32 %v359, %v366
    %v370 = vld [vmem:[%s3 + $0x1] sm:$0x1]
    %v371 = vlaneseq
    %v372 = vshrl.u32 %v371, 7
    %v373 = vsub.s32 0, %v372
    %v374 = vrot.slane %v370, %v373
    %v391 = vunpack.c.l.b16 %v245
    %v392 = vunpack.c.l.b16 %v246
    %v393 = vunpack.c.l.b16 %v247
    %v394 = vunpack.c.l.b16 %v248
    %v395 = vunpack.c.l.b16 %v249
    %v396 = vunpack.c.l.b16 %v250
    %v397 = vunpack.c.l.b16 %v251
    %v398 = vunpack.c.l.b16 %v252
    %v399 = vunpack.c.l.b16 %v253
    %v400 = vunpack.c.l.b16 %v254
    %v401 = vunpack.c.l.b16 %v255
    %v402 = vunpack.c.l.b16 %v256
    %v403 = vunpack.c.l.b16 %v257
    %v404 = vunpack.c.l.b16 %v258
    %v405 = vunpack.c.l.b16 %v259
    %v406 = vunpack.c.l.b16 %v260
    %v407 = vpack.c.b16 %v392, %v391
    %v408 = vpack.c.b16 %v394, %v393
    %v409 = vpack.c.b16 %v396, %v395
    %v410 = vpack.c.b16 %v398, %v397
    %v411 = vpack.c.b16 %v400, %v399
    %v412 = vpack.c.b16 %v402, %v401
    %v413 = vpack.c.b16 %v404, %v403
    %v414 = vpack.c.b16 %v406, %v405
    %423 = vmatprep.subr.bf16.mxu0 0
    %424 = vmatpush1.bf16.msra.mxu0 %v407
    %425 = vmatprep.subr.bf16.mxu0 0
    %426 = vmatpush1.bf16.msra.mxu0 %v408
    %427 = vmatprep.subr.bf16.mxu0 0
    %428 = vmatpush1.bf16.msra.mxu0 %v409
    %429 = vmatprep.subr.bf16.mxu0 0
    %430 = vmatpush1.bf16.msra.mxu0 %v410
    %431 = vmatprep.subr.bf16.mxu0 0
    %432 = vmatpush1.bf16.msra.mxu0 %v411
    %433 = vmatprep.subr.bf16.mxu0 0
    %434 = vmatpush1.bf16.msra.mxu0 %v412
    %435 = vmatprep.subr.bf16.mxu0 0
    %436 = vmatpush1.bf16.msra.mxu0 %v413
    %437 = vmatprep.subr.bf16.mxu0 0
    %438 = vmatpush1.bf16.msra.mxu0 %v414
    %439 = vmatprep.subr.bf16.mxu0 0
    %440 = vmatpush1.bf16.msra.mxu0 0
    %441 = vmatprep.subr.bf16.mxu0 0
    %442 = vmatpush1.bf16.msra.mxu0 0
    %443 = vmatprep.subr.bf16.mxu0 0
    %444 = vmatpush1.bf16.msra.mxu0 0
    %445 = vmatprep.subr.bf16.mxu0 0
    %446 = vmatpush1.bf16.msra.mxu0 0
    %447 = vmatprep.subr.bf16.mxu0 0
    %448 = vmatpush1.bf16.msra.mxu0 0
    %449 = vmatprep.subr.bf16.mxu0 0
    %450 = vmatpush1.bf16.msra.mxu0 0
    %451 = vmatprep.subr.bf16.mxu0 0
    %452 = vmatpush1.bf16.msra.mxu0 0
    %453 = vmatprep.subr.bf16.mxu0 0
    %454 = vmatpush1.bf16.msra.mxu0 0
    %455 = vmatprep.mubr.bf16.mxu0 0
    %456 = vmatmul.mubr.bf16.gmra.mrb[0].mxu0 %v271
    %v457 = vpop.f32.mrb[0].mxu0
    %v458 = vadd.f32 %v374, %v457
    %v459 = vpop.f32.mrb[0].mxu0
    %v460 = vpop.f32.mrb[0].mxu0
    %v461 = vadd.f32 %v374, %v460
    %v462 = vpop.f32.mrb[0].mxu0
    %463 = vdwg.mxu0
    %v464 = vmul.f32 %v458, %v366
    %v465 = vmul.f32 %v461, %v366
    %v466 = vsub.f32 0.0, %v464
    %v467 = vsub.f32 0.0, %v465
    %v468 = vmul.f32 %v466, 1.442695
    %v469 = vpow.pop %v468
    %v470 = vmul.f32 %v467, 1.442695
    %v471 = vpow.pop %v470
    %v472 = vadd.f32 %v469, 1.0
    %v473 = vadd.f32 %v471, 1.0
    %v474 = vrcp.pop %v472
    %v475 = vrcp.pop %v473
    %v476 = vmul.f32 %v368, %v464
    %v477 = vmul.f32 %v369, %v465
    %v478 = vmul.f32 %v476, %v474
    %v479 = vmul.f32 %v477, %v475
    %v480 = vpack.c.bf16 %v479, %v478
    %v482 = vunpack.c.l.b16 %v480
    %v483 = vunpack.c.h.b16 %v480
    %v484 = vpack.c.b16 %v482, %v482
    %v485 = vpack.c.b16 %v483, %v483
    %488 = vst [vmem:[%s5] sm:$0xf] %v484
    %489 = vst [vmem:[%s5 + $0x4] sm:$0xf] %v485
    // Predicated region
    $region104: #{gated_swiglu.1} parent=1 // pred_check
      _
    $region105: #{gated_swiglu.1} parent=1 // pred_check_branch
      %491 = sbr.rel (0) target = $region107
    $region106: #{gated_swiglu.1} parent=1 // pred_region
      _
    $region107: #{gated_swiglu.1} parent=1 // pred_fallthru
      _
    // Predicated region
    $region108: #{gated_swiglu.1} parent=1 // pred_check
      _
    $region109: #{gated_swiglu.1} parent=1 // pred_check_branch
      %493 = sbr.rel (0) target = $region111
    $region110: #{gated_swiglu.1} parent=1 // pred_region
      _
    $region111: #{gated_swiglu.1} parent=1 // pred_fallthru
      _

</llo_original>
